<compile_context>
chip_gen: v5e
topology: v5e:2x2
jax: 0.10.0
libtpu: 0.0.40
codegen_flags: <defaults>
</compile_context>

<pallas_src>
import functools
import math

import jax
import jax.numpy as jnp
from jax.experimental import pallas as pl
from jax.experimental.pallas import tpu as pltpu


def _round_up(a, b):
    return ((a + b - 1) // b) * b


def _cdiv(a, b):
    return (a + b - 1) // b


def _dot_f32(a, b):
    """MXU matmul with f32-faithful accuracy for the (critical) LHS.

    Splits the LHS into an exactly-bf16-representable head plus a small
    residual, so even a single-pass bf16 matmul implementation yields ~1e-5
    relative accuracy; with a native f32 matmul it is simply exact.  The
    matrices here are tiny (K or N == pack), so the extra pass is free.
    """
    a_hi = a.astype(jnp.bfloat16).astype(jnp.float32)
    a_lo = a - a_hi
    return (jnp.dot(a_hi, b, preferred_element_type=jnp.float32)
            + jnp.dot(a_lo, b, preferred_element_type=jnp.float32))


def _prenorm_ln_kernel(x_ref, g_ref, b_ref, o_ref, *, eps, dim, pack):
    """LayerNorm over `dim`-sized segments of the lane axis.

    x_ref: (block_rows, pack*dim) tile; each lane-row holds `pack` tokens.
    g_ref/b_ref: (1, pack*dim) affine params (gamma/beta tiled `pack` times).
    """
    x = x_ref[...].astype(jnp.float32)
    g = g_ref[...].astype(jnp.float32)
    b = b_ref[...].astype(jnp.float32)
    inv_dim = 1.0 / float(dim)

    if pack == 1:
        # One token per row: plain per-row reduction (biased variance, like
        # torch.nn.LayerNorm).
        mean = jnp.mean(x, axis=-1, keepdims=True)
        xc = x - mean
        var = jnp.mean(xc * xc, axis=-1, keepdims=True)
        y = xc * jax.lax.rsqrt(var + eps)
    else:
        # `pack` tokens per lane-row: segmented mean/var via MXU matmuls with
        # 0/1 segment-membership matrices (built from iota, tiny VPU work).
        #   S[l, j]  = 1 iff lane l belongs to token j
        #   ST[j, l] = S[l, j]
        lane_w = pack * dim
        lane = jax.lax.broadcasted_iota(jnp.int32, (lane_w, pack), 0)
        tok = jax.lax.broadcasted_iota(jnp.int32, (lane_w, pack), 1)
        lo = tok * dim
        S = ((lane >= lo) & (lane < lo + dim)).astype(jnp.float32)

        tok_t = jax.lax.broadcasted_iota(jnp.int32, (pack, lane_w), 0)
        lane_t = jax.lax.broadcasted_iota(jnp.int32, (pack, lane_w), 1)
        lo_t = tok_t * dim
        ST = ((lane_t >= lo_t) & (lane_t < lo_t + dim)).astype(jnp.float32)

        sums = _dot_f32(x, S)                        # (rows, pack) token sums
        mean_full = _dot_f32(sums * inv_dim, ST)     # broadcast mean to lanes
        xc = x - mean_full
        var = _dot_f32(xc * xc, S) * inv_dim         # (rows, pack) biased var
        inv = jax.lax.rsqrt(var + eps)               # compact EUP work
        inv_full = _dot_f32(inv, ST)                 # broadcast 1/sigma
        y = xc * inv_full

    o_ref[...] = (y * g + b).astype(o_ref.dtype)


def _choose_pack(dim):
    """How many tokens to pack side-by-side along the 128-lane axis."""
    if dim >= 128:
        return 1
    pack_exact = 128 // math.gcd(dim, 128)          # pack*dim multiple of 128
    if pack_exact * dim <= 512:
        return pack_exact
    # dim does not tile 128 cheaply (e.g. odd dims): still fill most of the
    # 128-lane row instead of leaving the lanes mostly masked.
    return max(1, 128 // dim)


def pallas_prenorm_layernorm(x2d, gamma, beta, *, eps=1e-5,
                             tile_budget_bytes=4 * 1024 * 1024):
    """LayerNorm over the last dim of a (rows, dim) array via Pallas."""
    rows, dim = x2d.shape
    pack = _choose_pack(dim)
    lane_w = pack * dim

    # Pad rows only to a multiple of `pack` (at most pack-1 rows, rare); the
    # row grid itself is non-divisible and relies on Pallas edge-block
    # handling (clamped reads, dropped out-of-range writes), so there is no
    # full pad/slice round-trip through HBM anymore.
    pad_rows = (-rows) % pack
    if pad_rows:
        x2d = jnp.pad(x2d, ((0, pad_rows), (0, 0)))
    total_rows = rows + pad_rows
    packed_rows = total_rows // pack
    xp = x2d.reshape(packed_rows, lane_w)   # contiguous row-major: free view

    # Row-block size: ~4 MiB f32-equivalent tile (>=85% of HBM roofline on
    # measured streaming kernels) while keeping double-buffered I/O plus f32
    # intermediates well under v7x's 64 MiB VMEM.  Cap so the grid keeps >=2
    # steps so ("parallel",) can shard across v7x's two TensorCores.
    if packed_rows < 8:
        block_rows = packed_rows            # single full block (== array dim)
    else:
        block_rows = tile_budget_bytes // (lane_w * 4)
        block_rows = max(8, (block_rows // 8) * 8)
        two_step_cap = _round_up(_cdiv(packed_rows, 2), 8)
        block_rows = max(8, min(block_rows, two_step_cap))

    grid = (_cdiv(packed_rows, block_rows),)

    # Affine params tiled to match the packed lane layout
    # [tok0 ch0..d-1 | tok1 ch0..d-1 | ...].
    g = jnp.tile(gamma.astype(jnp.float32).reshape(1, dim), (1, pack))
    b = jnp.tile(beta.astype(jnp.float32).reshape(1, dim), (1, pack))

    kernel = functools.partial(_prenorm_ln_kernel, eps=eps, dim=dim, pack=pack)

    out = pl.pallas_call(
        kernel,
        out_shape=jax.ShapeDtypeStruct((packed_rows, lane_w), x2d.dtype),
        grid_spec=pltpu.PrefetchScalarGridSpec(
            num_scalar_prefetch=0,
            grid=grid,
            in_specs=[
                pl.BlockSpec((block_rows, lane_w), lambda i: (i, 0)),
                pl.BlockSpec((1, lane_w), lambda i: (0, 0)),
                pl.BlockSpec((1, lane_w), lambda i: (0, 0)),
            ],
            out_specs=pl.BlockSpec((block_rows, lane_w), lambda i: (i, 0)),
        ),
        compiler_params=pltpu.CompilerParams(
            dimension_semantics=("parallel",),
            vmem_limit_bytes=48 * 1024 * 1024,
        ),
    )(xp, g, b)

    y = out.reshape(total_rows, dim)
    return y[:rows] if pad_rows else y


class PreNormPallas:
    """JAX/Pallas equivalent of PreNorm(dim, fn)."""

    def __init__(self, dim, fn, weight=None, bias=None, eps=1e-5):
        self.dim = dim
        self.fn = fn
        self.eps = eps
        # nn.LayerNorm(dim) init: weight = ones, bias = zeros; trained params
        # can be supplied via `weight` / `bias`.
        self.gamma = (jnp.ones((dim,), jnp.float32) if weight is None
                      else jnp.asarray(weight, jnp.float32))
        self.beta = (jnp.zeros((dim,), jnp.float32) if bias is None
                     else jnp.asarray(bias, jnp.float32))

    def __call__(self, x, *args, **kwargs):
        lead, d = x.shape[:-1], x.shape[-1]
        assert d == self.dim
        y2d = pallas_prenorm_layernorm(x.reshape(-1, d), self.gamma, self.beta,
                                       eps=self.eps)
        y = y2d.reshape(*lead, d)
        # TODO(synk): for MSAB, fuse the first matmul of `fn` (QKV / FFN-in
        # projection) into this kernel so the normalized activations never
        # round-trip through HBM; `fn` is an arbitrary callable here.
        return self.fn(y, *args, **kwargs)


if __name__ == "__main__":
    key = jax.random.PRNGKey(0)
    k1, k2, k3 = jax.random.split(key, 3)

    def ref_layernorm(x, g, b, eps=1e-5):
        mean = jnp.mean(x, axis=-1, keepdims=True)
        var = jnp.mean((x - mean) ** 2, axis=-1, keepdims=True)
        return (x - mean) * jax.lax.rsqrt(var + eps) * g + b

    # Case 1: dim=32 -> lane-packed path (4 tokens per 128-lane row), MXU
    # segmented reductions; 100 rows -> ragged last row block (no padding).
    B, N, dim = 2, 50, 32
    x = jax.random.normal(k1, (B, N, dim), dtype=jnp.float32)
    g = jax.random.normal(k2, (dim,), dtype=jnp.float32)
    b = jax.random.normal(k3, (dim,), dtype=jnp.float32)
    prenorm = PreNormPallas(dim, fn=lambda t: t, weight=g, bias=b)
    out = jax.block_until_ready(prenorm(x))
    ref = ref_layernorm(x, g, b)
    assert out.shape == (B, N, dim)
    assert jnp.max(jnp.abs(out - ref)) < 2e-4

    # Case 2: dim=128 -> already lane-dense, unpacked per-row reduction path,
    # ragged edge block (18 rows, 16-row blocks).
    dim2 = 128
    x2 = jax.random.normal(k1, (2, 9, dim2), dtype=jnp.float32)
    prenorm2 = PreNormPallas(dim2, fn=lambda t: t)
    out2 = jax.block_until_ready(prenorm2(x2))
    ref2 = ref_layernorm(x2, jnp.ones((dim2,), jnp.float32),
                         jnp.zeros((dim2,), jnp.float32))
    assert jnp.max(jnp.abs(out2 - ref2)) < 2e-4

    # Case 3: dim=32 with 50 rows per batch of 25 tokens -> rows % pack != 0,
    # exercises the small pad-to-pack path plus ragged edge block.
    x3 = jax.random.normal(k2, (2, 25, dim), dtype=jnp.float32)
    prenorm3 = PreNormPallas(dim, fn=lambda t: t, weight=g, bias=b)
    out3 = jax.block_until_ready(prenorm3(x3))
    ref3 = ref_layernorm(x3, g, b)
    assert out3.shape == (2, 25, dim)
    assert jnp.max(jnp.abs(out3 - ref3)) < 2e-4

    print("KERNEL_OK")
</pallas_src>

<mosaic_0001>
module attributes {stable_mosaic.version = 11 : i64} {
  func.func @_prenorm_ln_kernel(%arg0: i32, %arg1: memref<16x128xf32, #tpu.memory_space<vmem>>, %arg2: memref<1x128xf32, #tpu.memory_space<vmem>>, %arg3: memref<1x128xf32, #tpu.memory_space<vmem>>, %arg4: memref<16x128xf32, #tpu.memory_space<vmem>>) attributes {dimension_semantics = [#tpu.dimension_semantics<parallel>], iteration_bounds = array<i64: 2>, scalar_prefetch = 0 : i64, scratch_operands = 0 : i64, tpu.core_type = #tpu.core_type<tc>, window_params = [{transform_indices = @transform_0, window_bounds = array<i64: 16, 128>}, {pipeline_mode = #tpu.pipeline_mode<synchronous>, transform_indices = @transform_1, window_bounds = array<i64: 1, 128>}, {pipeline_mode = #tpu.pipeline_mode<synchronous>, transform_indices = @transform_2, window_bounds = array<i64: 1, 128>}, {transform_indices = @transform_3, window_bounds = array<i64: 16, 128>}]} {
    %c0 = arith.constant 0 : index
    %c0_0 = arith.constant 0 : index
    %0 = vector.load %arg1[%c0, %c0_0] : memref<16x128xf32, #tpu.memory_space<vmem>>, vector<16x128xf32>
    %c0_1 = arith.constant 0 : index
    %c0_2 = arith.constant 0 : index
    %1 = vector.load %arg2[%c0_1, %c0_2] : memref<1x128xf32, #tpu.memory_space<vmem>>, vector<1x128xf32>
    %c0_3 = arith.constant 0 : index
    %c0_4 = arith.constant 0 : index
    %2 = vector.load %arg3[%c0_3, %c0_4] : memref<1x128xf32, #tpu.memory_space<vmem>>, vector<1x128xf32>
    %3 = tpu.iota {dimensions = array<i32: 0>} : vector<128x4xi32>
    %4 = tpu.iota {dimensions = array<i32: 1>} : vector<128x4xi32>
    %c32_i32 = arith.constant 32 : i32
    %5 = vector.broadcast %c32_i32 : i32 to vector<128x4xi32>
    %6 = arith.muli %4, %5 : vector<128x4xi32>
    %7 = arith.cmpi sge, %3, %6 : vector<128x4xi32>
    %c32_i32_5 = arith.constant 32 : i32
    %8 = vector.broadcast %c32_i32_5 : i32 to vector<128x4xi32>
    %9 = arith.addi %6, %8 : vector<128x4xi32>
    %10 = arith.cmpi slt, %3, %9 : vector<128x4xi32>
    %11 = arith.andi %7, %10 : vector<128x4xi1>
    %12 = arith.extui %11 : vector<128x4xi1> to vector<128x4xi32>
    %13 = arith.sitofp %12 : vector<128x4xi32> to vector<128x4xf32>
    %14 = tpu.iota {dimensions = array<i32: 0>} : vector<4x128xi32>
    %15 = tpu.iota {dimensions = array<i32: 1>} : vector<4x128xi32>
    %c32_i32_6 = arith.constant 32 : i32
    %16 = vector.broadcast %c32_i32_6 : i32 to vector<4x128xi32>
    %17 = arith.muli %14, %16 : vector<4x128xi32>
    %18 = arith.cmpi sge, %15, %17 : vector<4x128xi32>
    %c32_i32_7 = arith.constant 32 : i32
    %19 = vector.broadcast %c32_i32_7 : i32 to vector<4x128xi32>
    %20 = arith.addi %17, %19 : vector<4x128xi32>
    %21 = arith.cmpi slt, %15, %20 : vector<4x128xi32>
    %22 = arith.andi %18, %21 : vector<4x128xi1>
    %23 = arith.extui %22 : vector<4x128xi1> to vector<4x128xi32>
    %24 = arith.sitofp %23 : vector<4x128xi32> to vector<4x128xf32>
    %25 = arith.truncf %0 : vector<16x128xf32> to vector<16x128xbf16>
    %26 = arith.extf %25 : vector<16x128xbf16> to vector<16x128xf32>
    %27 = arith.subf %0, %26 : vector<16x128xf32>
    %cst = arith.constant dense<0.000000e+00> : vector<16x4xf32>
    %28 = tpu.matmul %26, %13, %cst {dimension_numbers = #tpu.dot_dimension_numbers<[1], [0], [0], [1], [0, 0, 1, 1], [], []>} : vector<16x128xf32>, vector<128x4xf32>, vector<16x4xf32> -> vector<16x4xf32>
    %cst_8 = arith.constant dense<0.000000e+00> : vector<16x4xf32>
    %29 = tpu.matmul %27, %13, %cst_8 {dimension_numbers = #tpu.dot_dimension_numbers<[1], [0], [0], [1], [0, 0, 1, 1], [], []>} : vector<16x128xf32>, vector<128x4xf32>, vector<16x4xf32> -> vector<16x4xf32>
    %30 = arith.addf %28, %29 : vector<16x4xf32>
    %cst_9 = arith.constant 3.125000e-02 : f32
    %31 = vector.broadcast %cst_9 : f32 to vector<16x4xf32>
    %32 = arith.mulf %30, %31 : vector<16x4xf32>
    %33 = arith.truncf %32 : vector<16x4xf32> to vector<16x4xbf16>
    %34 = arith.extf %33 : vector<16x4xbf16> to vector<16x4xf32>
    %35 = arith.subf %32, %34 : vector<16x4xf32>
    %cst_10 = arith.constant dense<0.000000e+00> : vector<16x128xf32>
    %36 = tpu.matmul %34, %24, %cst_10 {dimension_numbers = #tpu.dot_dimension_numbers<[1], [0], [0], [1], [0, 0, 1, 1], [], []>} : vector<16x4xf32>, vector<4x128xf32>, vector<16x128xf32> -> vector<16x128xf32>
    %cst_11 = arith.constant dense<0.000000e+00> : vector<16x128xf32>
    %37 = tpu.matmul %35, %24, %cst_11 {dimension_numbers = #tpu.dot_dimension_numbers<[1], [0], [0], [1], [0, 0, 1, 1], [], []>} : vector<16x4xf32>, vector<4x128xf32>, vector<16x128xf32> -> vector<16x128xf32>
    %38 = arith.addf %36, %37 : vector<16x128xf32>
    %39 = arith.subf %0, %38 : vector<16x128xf32>
    %40 = arith.mulf %39, %39 : vector<16x128xf32>
    %41 = arith.truncf %40 : vector<16x128xf32> to vector<16x128xbf16>
    %42 = arith.extf %41 : vector<16x128xbf16> to vector<16x128xf32>
    %43 = arith.subf %40, %42 : vector<16x128xf32>
    %cst_12 = arith.constant dense<0.000000e+00> : vector<16x4xf32>
    %44 = tpu.matmul %42, %13, %cst_12 {dimension_numbers = #tpu.dot_dimension_numbers<[1], [0], [0], [1], [0, 0, 1, 1], [], []>} : vector<16x128xf32>, vector<128x4xf32>, vector<16x4xf32> -> vector<16x4xf32>
    %cst_13 = arith.constant dense<0.000000e+00> : vector<16x4xf32>
    %45 = tpu.matmul %43, %13, %cst_13 {dimension_numbers = #tpu.dot_dimension_numbers<[1], [0], [0], [1], [0, 0, 1, 1], [], []>} : vector<16x128xf32>, vector<128x4xf32>, vector<16x4xf32> -> vector<16x4xf32>
    %46 = arith.addf %44, %45 : vector<16x4xf32>
    %cst_14 = arith.constant 3.125000e-02 : f32
    %47 = vector.broadcast %cst_14 : f32 to vector<16x4xf32>
    %48 = arith.mulf %46, %47 : vector<16x4xf32>
    %cst_15 = arith.constant 9.99999974E-6 : f32
    %49 = vector.broadcast %cst_15 : f32 to vector<16x4xf32>
    %50 = arith.addf %48, %49 : vector<16x4xf32>
    %51 = math.rsqrt %50 : vector<16x4xf32>
    %52 = arith.truncf %51 : vector<16x4xf32> to vector<16x4xbf16>
    %53 = arith.extf %52 : vector<16x4xbf16> to vector<16x4xf32>
    %54 = arith.subf %51, %53 : vector<16x4xf32>
    %cst_16 = arith.constant dense<0.000000e+00> : vector<16x128xf32>
    %55 = tpu.matmul %53, %24, %cst_16 {dimension_numbers = #tpu.dot_dimension_numbers<[1], [0], [0], [1], [0, 0, 1, 1], [], []>} : vector<16x4xf32>, vector<4x128xf32>, vector<16x128xf32> -> vector<16x128xf32>
    %cst_17 = arith.constant dense<0.000000e+00> : vector<16x128xf32>
    %56 = tpu.matmul %54, %24, %cst_17 {dimension_numbers = #tpu.dot_dimension_numbers<[1], [0], [0], [1], [0, 0, 1, 1], [], []>} : vector<16x4xf32>, vector<4x128xf32>, vector<16x128xf32> -> vector<16x128xf32>
    %57 = arith.addf %55, %56 : vector<16x128xf32>
    %58 = arith.mulf %39, %57 : vector<16x128xf32>
    %59 = vector.broadcast %1 : vector<1x128xf32> to vector<16x128xf32>
    %60 = arith.mulf %58, %59 : vector<16x128xf32>
    %61 = vector.broadcast %2 : vector<1x128xf32> to vector<16x128xf32>
    %62 = arith.addf %60, %61 : vector<16x128xf32>
    %c0_18 = arith.constant 0 : index
    %c0_19 = arith.constant 0 : index
    %63 = vector.load %arg4[%c0_18, %c0_19] : memref<16x128xf32, #tpu.memory_space<vmem>>, vector<16x128xf32>
    tpu.vector_store %arg4[%c0_18, %c0_19], %62 {strides = array<i32>} : memref<16x128xf32, #tpu.memory_space<vmem>>, vector<16x128xf32>,
    return
  }
  func.func @transform_0(%arg0: i32) -> (i32, i32) {
    %c0_i32 = arith.constant 0 : i32
    %c0_i32_0 = arith.constant 0 : i32
    return %arg0, %c0_i32 : i32, i32
  }
  func.func @transform_1(%arg0: i32) -> (i32, i32) {
    %c0_i32 = arith.constant 0 : i32
    %c0_i32_0 = arith.constant 0 : i32
    %c0_i32_1 = arith.constant 0 : i32
    return %c0_i32, %c0_i32_0 : i32, i32
  }
  func.func @transform_2(%arg0: i32) -> (i32, i32) {
    %c0_i32 = arith.constant 0 : i32
    %c0_i32_0 = arith.constant 0 : i32
    %c0_i32_1 = arith.constant 0 : i32
    return %c0_i32, %c0_i32_0 : i32, i32
  }
  func.func @transform_3(%arg0: i32) -> (i32, i32) {
    %c0_i32 = arith.constant 0 : i32
    %c0_i32_0 = arith.constant 0 : i32
    return %arg0, %c0_i32 : i32, i32
  }
}

</mosaic_0001>

<llo_original>
// kernel: tpu_custom_call.1
$region0: #{tpu_custom_call.1}
  #allocation0 [shape = 'u32[]', space=smem, size = 0x4, offset = 0x4, fixed_abs, tag = 'smem constant byte address 0x4 - core index']
  #allocation1 [shape = 'u32[72,128]{1,0:T(1,128)}', space=vmem, size = 0x9000, scoped, tag = 'internal scratch']
  %s0 = inlined_call_operand.hbm [shape: f32[25,128], index: 0, kind: input, shape index: {}]
  %s1 = inlined_call_operand.hbm [shape: f32[1,128], index: 1, kind: input, shape index: {}]
  %s2 = inlined_call_operand.vmem [shape: f32[1,128], index: 2, kind: input, shape index: {}]
  %s3 = inlined_call_operand.hbm [shape: f32[25,128], index: 3, kind: output, shape index: {}]
  %s4 = sld [smem:[#allocation0]]
  $region53: #{tpu_custom_call.1} parent=0
    _
  %s6 = ssub.s32 1, %s4
  %s7 = scalar_select 0, %s6, %s4
  $region1: #{tpu_custom_call.1} parent=0
    #allocation2 [shape = 'u8[16384]{0}', space=vmem, size = 0x4000, scoped, tag = 'input window, operand 0']
    #allocation3 [shape = 's32[2]{0}', space=sflag, size = 0x8, scoped, tag = 'scoped memory for tpu_custom_call.1']
    #allocation4 [shape = 's32[2]{0}', space=sflag, size = 0x8, scoped, tag = 'scoped memory for tpu_custom_call.1']
    #allocation5 [shape = 'u8[512]{0}', space=vmem, size = 0x400, scoped, tag = 'input window, operand 1, single buffered']
    #allocation6 [shape = 's32[1]{0}', space=sflag, size = 0x4, scoped, tag = 'scoped memory for tpu_custom_call.1']
    #allocation7 [shape = 'u8[16384]{0}', space=vmem, size = 0x4000, scoped, tag = 'output window, operand 0']
    %8 = vsyncpa [#allocation3], 0
    %s9 = scalar_lea.sflag [#allocation3], 1
    %10 = vsyncpa %s9, 0
    %11 = vsyncpa [#allocation6], 0
    %12 = vsyncpa [#allocation4], 0
    %s13 = scalar_lea.sflag [#allocation4], 1
    %14 = vsyncpa %s13, 0
    loop: start=0, step=1, limit=4
    $region2: #{tpu_custom_call.1} parent=1 // loop_pre_header
      _
    $region3: #{tpu_custom_call.1} parent=1 // loop_header
      %s16 = sphi 0, %s20
      %p17 = scmp.ge.s32.totalorder %s16, 4
      %s26 = sphi 0, %s28
      %s29 = sphi 0, %s26
      %s30 = sphi 0, %s29
      %s46 = sphi 0, %s30
      %s50 = sphi 0, %s50
      %s52 = sphi 0, %s50
      %s53 = sphi 0, %s52
      %s67 = sphi 0, %s53
      %s71 = sphi 0, %s71
      %s73 = sphi 0, %s71
      %s74 = sphi 0, %s73
      %s88 = sphi 0, %s74
      %s94 = sphi 0, %s96
      %s97 = sphi 0, %s94
      %s98 = sphi 0, %s97
      %s114 = sphi 0, %s98
    $region4: #{tpu_custom_call.1} parent=1 // loop_header_branch
      %19 = sbr.rel (%p17) target = $region8
    $region5: #{tpu_custom_call.1} parent=1 // loop_body
      %s21 = ssub.s32 %s16, 1
      %s22 = ssub.s32 %s16, 2
      %s23 = sadd.s32 %s16, 1
      %s24 = ssub.s32 %s16, %s23
      %p25 = scmp.eq.s32.totalorder %s24, 0
      %s27 = sadd.s32 %s26, 1
      %s28 = scalar_select %p25, %s26, %s27
      %p31 = pneg %p25
      %p32 = scmp.eq.s32.totalorder %s16, 1
      %p33 = por %p31, %p32
      %p34 = scmp.ne.s32.totalorder %s26, %s29
      %p35 = scmp.eq.s32.totalorder %s16, 0
      %p36 = por %p34, %p35
      %p37 = scmp.ne.s32.totalorder %s26, %s29
      %p38 = scmp.eq.s32.totalorder %s21, 1
      %p39 = por %p37, %p38
      %p40 = scmp.ne.s32.totalorder %s29, %s30
      %p41 = scmp.eq.s32.totalorder %s21, 0
      %p42 = por %p40, %p41
      %p43 = scmp.ne.s32.totalorder %s29, %s30
      %p44 = scmp.eq.s32.totalorder %s22, 1
      %p45 = por %p43, %p44
      %p47 = scmp.ne.s32.totalorder %s30, %s46
      %p48 = scmp.eq.s32.totalorder %s22, 0
      %p49 = por %p47, %p48
      %s51 = sadd.s32 %s50, 1
      %p54 = scmp.eq.s32.totalorder %s16, 1
      %p55 = scmp.ne.s32.totalorder %s50, %s52
      %p56 = scmp.eq.s32.totalorder %s16, 0
      %p57 = por %p55, %p56
      %p58 = scmp.ne.s32.totalorder %s50, %s52
      %p59 = scmp.eq.s32.totalorder %s21, 1
      %p60 = por %p58, %p59
      %p61 = scmp.ne.s32.totalorder %s52, %s53
      %p62 = scmp.eq.s32.totalorder %s21, 0
      %p63 = por %p61, %p62
      %p64 = scmp.ne.s32.totalorder %s52, %s53
      %p65 = scmp.eq.s32.totalorder %s22, 1
      %p66 = por %p64, %p65
      %p68 = scmp.ne.s32.totalorder %s53, %s67
      %p69 = scmp.eq.s32.totalorder %s22, 0
      %p70 = por %p68, %p69
      %s72 = sadd.s32 %s71, 1
      %p75 = scmp.eq.s32.totalorder %s16, 1
      %p76 = scmp.ne.s32.totalorder %s71, %s73
      %p77 = scmp.eq.s32.totalorder %s16, 0
      %p78 = por %p76, %p77
      %p79 = scmp.ne.s32.totalorder %s71, %s73
      %p80 = scmp.eq.s32.totalorder %s21, 1
      %p81 = por %p79, %p80
      %p82 = scmp.ne.s32.totalorder %s73, %s74
      %p83 = scmp.eq.s32.totalorder %s21, 0
      %p84 = por %p82, %p83
      %p85 = scmp.ne.s32.totalorder %s73, %s74
      %p86 = scmp.eq.s32.totalorder %s22, 1
      %p87 = por %p85, %p86
      %p89 = scmp.ne.s32.totalorder %s74, %s88
      %p90 = scmp.eq.s32.totalorder %s22, 0
      %p91 = por %p89, %p90
      %s92 = ssub.s32 %s16, %s23
      %p93 = scmp.eq.s32.totalorder %s92, 0
      %s95 = sadd.s32 %s94, 1
      %s96 = scalar_select %p93, %s94, %s95
      %p99 = pneg %p93
      %p100 = scmp.eq.s32.totalorder %s16, 1
      %p101 = por %p99, %p100
      %p102 = scmp.ne.s32.totalorder %s94, %s97
      %p103 = scmp.eq.s32.totalorder %s16, 0
      %p104 = por %p102, %p103
      %p105 = scmp.ne.s32.totalorder %s94, %s97
      %p106 = scmp.eq.s32.totalorder %s21, 1
      %p107 = por %p105, %p106
      %p108 = scmp.ne.s32.totalorder %s97, %s98
      %p109 = scmp.eq.s32.totalorder %s21, 0
      %p110 = por %p108, %p109
      %p111 = scmp.ne.s32.totalorder %s97, %s98
      %p112 = scmp.eq.s32.totalorder %s22, 1
      %p113 = por %p111, %p112
      %p115 = scmp.ne.s32.totalorder %s98, %s114
      %p116 = scmp.eq.s32.totalorder %s22, 0
      %p117 = por %p115, %p116
      %p118 = scmp.le.s32.totalorder 1, %s16
      %p119 = scmp.lt.s32.totalorder %s16, 3
      %p120 = pnand %p118, %p119
      %p121 = pneg %p120
      // Predicated region
      $region9: #{tpu_custom_call.1} parent=5 // pred_check
        _
      $region10: #{tpu_custom_call.1} parent=5 // pred_check_branch
        %123 = sbr.rel (%p120) target = $region12
      $region11: #{tpu_custom_call.1} parent=5 // pred_region
        %s124 = ssub.s32 %s16, 1
        // Predicated region
        $region13: #{tpu_custom_call.1} parent=11 // pred_check
          %p125 = pneg %p63
        $region14: #{tpu_custom_call.1} parent=11 // pred_check_branch
          %127 = sbr.rel (%p125) target = $region16
        $region15: #{tpu_custom_call.1} parent=11 // pred_region
          %129 = vsyncadd [#allocation6], 0
          %s131 = sshll.u32 %s1, 4
          %s132 = int_to_ptr.hbm [resolvable:$true] %s131
          %s133 = sshll.u32 [#allocation5], 4
          %s134 = int_to_ptr.vmem [resolvable:$true] %s133
          %136 = dma.hbm_to_vmem [thread:$0]  %s132, 16, %s134, [#allocation6]
        $region16: #{tpu_custom_call.1} parent=11 // pred_fallthru
          _
        // Predicated region
        $region17: #{tpu_custom_call.1} parent=11 // pred_check
          %p137 = pneg %p84
        $region18: #{tpu_custom_call.1} parent=11 // pred_check_branch
          %139 = sbr.rel (%p137) target = $region20
        $region19: #{tpu_custom_call.1} parent=11 // pred_region
          _
        $region20: #{tpu_custom_call.1} parent=11 // pred_fallthru
          _
      $region12: #{tpu_custom_call.1} parent=5 // pred_fallthru
        _
      %p140 = scmp.lt.s32.totalorder %s16, 2
      // Predicated region
      $region21: #{tpu_custom_call.1} parent=5 // pred_check
        %p141 = pneg %p140
      $region22: #{tpu_custom_call.1} parent=5 // pred_check_branch
        %143 = sbr.rel (%p141) target = $region24
      $region23: #{tpu_custom_call.1} parent=5 // pred_region
        // Predicated region
        $region25: #{tpu_custom_call.1} parent=23 // pred_check
          %p144 = pneg %p36
        $region26: #{tpu_custom_call.1} parent=23 // pred_check_branch
          %146 = sbr.rel (%p144) target = $region28
        $region27: #{tpu_custom_call.1} parent=23 // pred_region
          %s147 = sand.u32 %s26, 1
          %s148 = scalar_lea.sflag [#allocation3], %s147
          %s149 = sand.u32 %s26, 1
          %s150 = smul.addr %s149, 16
          %s151 = scalar_lea.vmem [#allocation2], %s150
          %s152 = smul.u32 2, %s16
          %154 = vsyncadd %s148, 0
          %s155 = smul.addr %s152, 8
          %s156 = scalar_lea.hbm %s0, %s155
          %s157 = sshll.u32 %s156, 4
          %s158 = int_to_ptr.hbm [resolvable:$true] %s157
          %s159 = sshll.u32 %s151, 4
          %s160 = int_to_ptr.vmem [resolvable:$true] %s159
          %165 = dma.hbm_to_vmem [thread:$0]  %s158, 256, %s160, %s148, 128, 128, 8
        $region28: #{tpu_custom_call.1} parent=23 // pred_fallthru
          _
      $region24: #{tpu_custom_call.1} parent=5 // pred_fallthru
        _
      %p166 = scmp.le.s32.totalorder 1, %s16
      %p167 = scmp.lt.s32.totalorder %s16, 3
      %p168 = pnand %p166, %p167
      %p169 = pneg %p168
      // Predicated region
      $region29: #{tpu_custom_call.1} parent=5 // pred_check
        _
      $region30: #{tpu_custom_call.1} parent=5 // pred_check_branch
        %171 = sbr.rel (%p168) target = $region32
      $region31: #{tpu_custom_call.1} parent=5 // pred_region
        %s172 = ssub.s32 %s16, 1
        %s173 = sand.u32 %s29, 1
        %s174 = scalar_lea.sflag [#allocation3], %s173
        %s175 = sand.u32 %s29, 1
        %s176 = smul.addr %s175, 16
        %s177 = scalar_lea.vmem [#allocation2], %s176
        // Predicated region
        $region33: #{tpu_custom_call.1} parent=31 // pred_check
          %p178 = pneg %p42
        $region34: #{tpu_custom_call.1} parent=31 // pred_check_branch
          %180 = sbr.rel (%p178) target = $region36
        $region35: #{tpu_custom_call.1} parent=31 // pred_region
          %182 = dma.done %s174, 256
        $region36: #{tpu_custom_call.1} parent=31 // pred_fallthru
          _
        // Predicated region
        $region37: #{tpu_custom_call.1} parent=31 // pred_check
          %p183 = pneg %p63
        $region38: #{tpu_custom_call.1} parent=31 // pred_check_branch
          %185 = sbr.rel (%p183) target = $region40
        $region39: #{tpu_custom_call.1} parent=31 // pred_region
          %187 = dma.done [#allocation6], 16
        $region40: #{tpu_custom_call.1} parent=31 // pred_fallthru
          _
        %s188 = sand.u32 %s29, 1
        %s189 = scalar_lea.sflag [#allocation3], %s188
        %s190 = sand.u32 %s29, 1
        %s191 = smul.addr %s190, 16
        %s192 = scalar_lea.vmem [#allocation2], %s191
        %p193 = pneg %p42
        %p194 = pneg %p39
        %p195 = pneg %p63
        %p196 = pneg %p60
        %p197 = pneg %p84
        %p198 = pneg %p81
        %p199 = pneg %p110
        %p200 = pneg %p107
        %s201 = sand.u32 %s97, 1
        %s202 = scalar_lea.sflag [#allocation4], %s201
        %s203 = sand.u32 %s97, 1
        %s204 = smul.addr %s203, 16
        %s205 = scalar_lea.vmem [#allocation7], %s204
        %s206 = smul.u32 2, %s21
        %s207 = smul.u32 2, %s21
        %v208 = vld [vmem:[%s177] sm:$0xff]
        %v209 = vld [vmem:[%s177 + $0x8] sm:$0xff]
        %v210 = vld [vmem:[#allocation5] sm:$0x1]
        %v211 = vld [vmem:[%s2] sm:$0x1]
        %v212 = vlaneseq
        %v213 = vshrl.u32 %v212, 7
        %v214 = vadd.s32 %v213, 8
        %v215 = vadd.s32 %v213, 16
        %v216 = vadd.s32 %v213, 24
        %v217 = vadd.s32 %v213, 32
        %v218 = vadd.s32 %v213, 40
        %v219 = vadd.s32 %v213, 48
        %v220 = vadd.s32 %v213, 56
        %v221 = vadd.s32 %v213, 64
        %v222 = vadd.s32 %v213, 72
        %v223 = vadd.s32 %v213, 80
        %v224 = vadd.s32 %v213, 88
        %v225 = vadd.s32 %v213, 96
        %v226 = vadd.s32 %v213, 104
        %v227 = vadd.s32 %v213, 112
        %v228 = vadd.s32 %v213, 120
        %v229 = vlaneseq
        %v230 = vand.u32 %v229, 127
        %v231 = vmul.u32 %v230, 32
        %vm232 = vcmp.ge.s32.totalorder %v213, %v231
        %vm233 = vcmp.ge.s32.totalorder %v214, %v231
        %vm234 = vcmp.ge.s32.totalorder %v215, %v231
        %vm235 = vcmp.ge.s32.totalorder %v216, %v231
        %vm236 = vcmp.ge.s32.totalorder %v217, %v231
        %vm237 = vcmp.ge.s32.totalorder %v218, %v231
        %vm238 = vcmp.ge.s32.totalorder %v219, %v231
        %vm239 = vcmp.ge.s32.totalorder %v220, %v231
        %vm240 = vcmp.ge.s32.totalorder %v221, %v231
        %vm241 = vcmp.ge.s32.totalorder %v222, %v231
        %vm242 = vcmp.ge.s32.totalorder %v223, %v231
        %vm243 = vcmp.ge.s32.totalorder %v224, %v231
        %vm244 = vcmp.ge.s32.totalorder %v225, %v231
        %vm245 = vcmp.ge.s32.totalorder %v226, %v231
        %vm246 = vcmp.ge.s32.totalorder %v227, %v231
        %vm247 = vcmp.ge.s32.totalorder %v228, %v231
        %v248 = vadd.s32 %v231, 32
        %vm249 = vcmp.lt.s32.totalorder %v213, %v248
        %vm250 = vcmp.lt.s32.totalorder %v214, %v248
        %vm251 = vcmp.lt.s32.totalorder %v215, %v248
        %vm252 = vcmp.lt.s32.totalorder %v216, %v248
        %vm253 = vcmp.lt.s32.totalorder %v217, %v248
        %vm254 = vcmp.lt.s32.totalorder %v218, %v248
        %vm255 = vcmp.lt.s32.totalorder %v219, %v248
        %vm256 = vcmp.lt.s32.totalorder %v220, %v248
        %vm257 = vcmp.lt.s32.totalorder %v221, %v248
        %vm258 = vcmp.lt.s32.totalorder %v222, %v248
        %vm259 = vcmp.lt.s32.totalorder %v223, %v248
        %vm260 = vcmp.lt.s32.totalorder %v224, %v248
        %vm261 = vcmp.lt.s32.totalorder %v225, %v248
        %vm262 = vcmp.lt.s32.totalorder %v226, %v248
        %vm263 = vcmp.lt.s32.totalorder %v227, %v248
        %vm264 = vcmp.lt.s32.totalorder %v228, %v248
        %vm265 = vmand %vm232, %vm249
        %vm266 = vmand %vm233, %vm250
        %vm267 = vmand %vm234, %vm251
        %vm268 = vmand %vm235, %vm252
        %vm269 = vmand %vm236, %vm253
        %vm270 = vmand %vm237, %vm254
        %vm271 = vmand %vm238, %vm255
        %vm272 = vmand %vm239, %vm256
        %vm273 = vmand %vm240, %vm257
        %vm274 = vmand %vm241, %vm258
        %vm275 = vmand %vm242, %vm259
        %vm276 = vmand %vm243, %vm260
        %vm277 = vmand %vm244, %vm261
        %vm278 = vmand %vm245, %vm262
        %vm279 = vmand %vm246, %vm263
        %vm280 = vmand %vm247, %vm264
        %v281 = vsel %vm265, 1, 0
        %v282 = vsel %vm266, 1, 0
        %v283 = vsel %vm267, 1, 0
        %v284 = vsel %vm268, 1, 0
        %v285 = vsel %vm269, 1, 0
        %v286 = vsel %vm270, 1, 0
        %v287 = vsel %vm271, 1, 0
        %v288 = vsel %vm272, 1, 0
        %v289 = vsel %vm273, 1, 0
        %v290 = vsel %vm274, 1, 0
        %v291 = vsel %vm275, 1, 0
        %v292 = vsel %vm276, 1, 0
        %v293 = vsel %vm277, 1, 0
        %v294 = vsel %vm278, 1, 0
        %v295 = vsel %vm279, 1, 0
        %v296 = vsel %vm280, 1, 0
        %v297 = vcvt.s32.f32 %v281
        %v298 = vcvt.s32.f32 %v282
        %v299 = vcvt.s32.f32 %v283
        %v300 = vcvt.s32.f32 %v284
        %v301 = vcvt.s32.f32 %v285
        %v302 = vcvt.s32.f32 %v286
        %v303 = vcvt.s32.f32 %v287
        %v304 = vcvt.s32.f32 %v288
        %v305 = vcvt.s32.f32 %v289
        %v306 = vcvt.s32.f32 %v290
        %v307 = vcvt.s32.f32 %v291
        %v308 = vcvt.s32.f32 %v292
        %v309 = vcvt.s32.f32 %v293
        %v310 = vcvt.s32.f32 %v294
        %v311 = vcvt.s32.f32 %v295
        %v312 = vcvt.s32.f32 %v296
        %v313 = vmul.u32 %v213, 32
        %vm314 = vcmp.ge.s32.totalorder %v230, %v313
        %v315 = vadd.s32 %v313, 32
        %vm316 = vcmp.lt.s32.totalorder %v230, %v315
        %vm317 = vmand %vm314, %vm316
        %v318 = vsel %vm317, 1, 0
        %v319 = vcvt.s32.f32 %v318
        %v320 = vpack.c.bf16 %v208, %v208
        %v321 = vpack.c.bf16 %v209, %v209
        %v322 = vunpack.c.l.bf16 %v320
        %v323 = vunpack.c.l.bf16 %v321
        %v324 = vsub.f32 %v208, %v322
        %v325 = vsub.f32 %v209, %v323
        %326 = vmatpush.msra.mxu0 %v312
        %327 = vmatpush.msra.mxu0 %v311
        %328 = vmatpush.msra.mxu0 %v310
        %329 = vmatpush.msra.mxu0 %v309
        %330 = vmatpush.msra.mxu0 %v308
        %331 = vmatpush.msra.mxu0 %v307
        %332 = vmatpush.msra.mxu0 %v306
        %333 = vmatpush.msra.mxu0 %v305
        %334 = vmatpush.msra.mxu0 %v304
        %335 = vmatpush.msra.mxu0 %v303
        %336 = vmatpush.msra.mxu0 %v302
        %337 = vmatpush.msra.mxu0 %v301
        %338 = vmatpush.msra.mxu0 %v300
        %339 = vmatpush.msra.mxu0 %v299
        %340 = vmatpush.msra.mxu0 %v298
        %341 = vmatpush.msra.mxu0 %v297
        %342 = vmatmul.f32.gmra.mxu0 %v324
        %v343 = vpop.f32.mrf.mxu0
        %v344 = vadd.f32 0.0, %v343
        %345 = vmatmul.f32.gmra.mxu0 %v325
        %v346 = vpop.f32.mrf.mxu0
        %v347 = vadd.f32 0.0, %v346
        %348 = vdwg.mxu0
        %349 = vmatpush.msra.mxu0 %v312
        %350 = vmatpush.msra.mxu0 %v311
        %351 = vmatpush.msra.mxu0 %v310
        %352 = vmatpush.msra.mxu0 %v309
        %353 = vmatpush.msra.mxu0 %v308
        %354 = vmatpush.msra.mxu0 %v307
        %355 = vmatpush.msra.mxu0 %v306
        %356 = vmatpush.msra.mxu0 %v305
        %357 = vmatpush.msra.mxu0 %v304
        %358 = vmatpush.msra.mxu0 %v303
        %359 = vmatpush.msra.mxu0 %v302
        %360 = vmatpush.msra.mxu0 %v301
        %361 = vmatpush.msra.mxu0 %v300
        %362 = vmatpush.msra.mxu0 %v299
        %363 = vmatpush.msra.mxu0 %v298
        %364 = vmatpush.msra.mxu0 %v297
        %365 = vmatmul.f32.gmra.mxu0 %v322
        %v366 = vpop.f32.mrf.mxu0
        %v367 = vadd.f32 %v344, %v366
        %368 = vmatmul.f32.gmra.mxu0 %v323
        %v369 = vpop.f32.mrf.mxu0
        %v370 = vadd.f32 %v347, %v369
        %371 = vdwg.mxu0
        %v372 = vmul.f32 %v367, 0.03125
        %v373 = vmul.f32 %v370, 0.03125
        %v374 = vpack.c.bf16 %v372, %v372
        %v375 = vpack.c.bf16 %v373, %v373
        %v376 = vunpack.c.l.bf16 %v374
        %v377 = vunpack.c.l.bf16 %v375
        %v378 = vsub.f32 %v372, %v376
        %v379 = vsub.f32 %v373, %v377
        %vm380 = vcmask 31744
        %v382 = vsel %vm380, %v378, 0
        %v385 = vsel %vm380, %v379, 0
        %vm387 = vcmask 1043456
        %v389 = vsel %vm387, %v319, 0
        %391 = vmatpush.msra.mxu0 0.0
        %392 = vmatpush.msra.mxu0 0.0
        %393 = vmatpush.msra.mxu0 0.0
        %394 = vmatpush.msra.mxu0 0.0
        %395 = vmatpush.msra.mxu0 0.0
        %396 = vmatpush.msra.mxu0 0.0
        %397 = vmatpush.msra.mxu0 0.0
        %398 = vmatpush.msra.mxu0 0.0
        %399 = vmatpush.msra.mxu0 0.0
        %400 = vmatpush.msra.mxu0 0.0
        %401 = vmatpush.msra.mxu0 0.0
        %402 = vmatpush.msra.mxu0 0.0
        %403 = vmatpush.msra.mxu0 0.0
        %404 = vmatpush.msra.mxu0 0.0
        %405 = vmatpush.msra.mxu0 0.0
        %406 = vmatpush.msra.mxu0 %v389
        %407 = vmatmul.f32.gmra.mxu0 %v382
        %v408 = vpop.f32.mrf.mxu0
        %v409 = vadd.f32 0.0, %v408
        %410 = vmatmul.f32.gmra.mxu0 %v385
        %v411 = vpop.f32.mrf.mxu0
        %v412 = vadd.f32 0.0, %v411
        %413 = vdwg.mxu0
        %v415 = vsel %vm380, %v376, 0
        %v418 = vsel %vm380, %v377, 0
        %420 = vmatpush.msra.mxu0 0.0
        %421 = vmatpush.msra.mxu0 0.0
        %422 = vmatpush.msra.mxu0 0.0
        %423 = vmatpush.msra.mxu0 0.0
        %424 = vmatpush.msra.mxu0 0.0
        %425 = vmatpush.msra.mxu0 0.0
        %426 = vmatpush.msra.mxu0 0.0
        %427 = vmatpush.msra.mxu0 0.0
        %428 = vmatpush.msra.mxu0 0.0
        %429 = vmatpush.msra.mxu0 0.0
        %430 = vmatpush.msra.mxu0 0.0
        %431 = vmatpush.msra.mxu0 0.0
        %432 = vmatpush.msra.mxu0 0.0
        %433 = vmatpush.msra.mxu0 0.0
        %434 = vmatpush.msra.mxu0 0.0
        %435 = vmatpush.msra.mxu0 %v389
        %436 = vmatmul.f32.gmra.mxu0 %v415
        %v437 = vpop.f32.mrf.mxu0
        %v438 = vadd.f32 %v409, %v437
        %439 = vmatmul.f32.gmra.mxu0 %v418
        %v440 = vpop.f32.mrf.mxu0
        %v441 = vadd.f32 %v412, %v440
        %442 = vdwg.mxu0
        %v443 = vsub.f32 %v208, %v438
        %v444 = vsub.f32 %v209, %v441
        %v445 = vmul.f32 %v443, %v443
        %v446 = vmul.f32 %v444, %v444
        %v447 = vpack.c.bf16 %v445, %v445
        %v448 = vpack.c.bf16 %v446, %v446
        %v449 = vunpack.c.l.bf16 %v447
        %v450 = vunpack.c.l.bf16 %v448
        %v451 = vsub.f32 %v445, %v449
        %v452 = vsub.f32 %v446, %v450
        %453 = vmatpush.msra.mxu0 %v312
        %454 = vmatpush.msra.mxu0 %v311
        %455 = vmatpush.msra.mxu0 %v310
        %456 = vmatpush.msra.mxu0 %v309
        %457 = vmatpush.msra.mxu0 %v308
        %458 = vmatpush.msra.mxu0 %v307
        %459 = vmatpush.msra.mxu0 %v306
        %460 = vmatpush.msra.mxu0 %v305
        %461 = vmatpush.msra.mxu0 %v304
        %462 = vmatpush.msra.mxu0 %v303
        %463 = vmatpush.msra.mxu0 %v302
        %464 = vmatpush.msra.mxu0 %v301
        %465 = vmatpush.msra.mxu0 %v300
        %466 = vmatpush.msra.mxu0 %v299
        %467 = vmatpush.msra.mxu0 %v298
        %468 = vmatpush.msra.mxu0 %v297
        %469 = vmatmul.f32.gmra.mxu0 %v451
        %v470 = vpop.f32.mrf.mxu0
        %v471 = vadd.f32 0.0, %v470
        %472 = vmatmul.f32.gmra.mxu0 %v452
        %v473 = vpop.f32.mrf.mxu0
        %v474 = vadd.f32 0.0, %v473
        %475 = vdwg.mxu0
        %476 = vmatpush.msra.mxu0 %v312
        %477 = vmatpush.msra.mxu0 %v311
        %478 = vmatpush.msra.mxu0 %v310
        %479 = vmatpush.msra.mxu0 %v309
        %480 = vmatpush.msra.mxu0 %v308
        %481 = vmatpush.msra.mxu0 %v307
        %482 = vmatpush.msra.mxu0 %v306
        %483 = vmatpush.msra.mxu0 %v305
        %484 = vmatpush.msra.mxu0 %v304
        %485 = vmatpush.msra.mxu0 %v303
        %486 = vmatpush.msra.mxu0 %v302
        %487 = vmatpush.msra.mxu0 %v301
        %488 = vmatpush.msra.mxu0 %v300
        %489 = vmatpush.msra.mxu0 %v299
        %490 = vmatpush.msra.mxu0 %v298
        %491 = vmatpush.msra.mxu0 %v297
        %492 = vmatmul.f32.gmra.mxu0 %v449
        %v493 = vpop.f32.mrf.mxu0
        %v494 = vadd.f32 %v471, %v493
        %495 = vmatmul.f32.gmra.mxu0 %v450
        %v496 = vpop.f32.mrf.mxu0
        %v497 = vadd.f32 %v474, %v496
        %498 = vdwg.mxu0
        %v499 = vmul.f32 %v494, 0.03125
        %v500 = vmul.f32 %v497, 0.03125
        %v501 = vadd.f32 %v499, 1e-05
        %v502 = vadd.f32 %v500, 1e-05
        %v503 = vrsqrt.pop %v501
        %v504 = vmul.f32 %v503, %v501
        %v505 = vmul.f32 %v504, %v503
        %v506 = vmul.f32 0.5, %v505
        %v507 = vsub.f32 1.5, %v506
        %v508 = vmul.f32 %v503, %v507
        %vm509 = vweird.f32 %v501
        %vm510 = vweird.f32 %v503
        %vm511 = vmor %vm509, %vm510
        %v512 = vsel %vm511, %v503, %v508
        %v513 = vrsqrt.pop %v502
        %v514 = vmul.f32 %v513, %v502
        %v515 = vmul.f32 %v514, %v513
        %v516 = vmul.f32 0.5, %v515
        %v517 = vsub.f32 1.5, %v516
        %v518 = vmul.f32 %v513, %v517
        %vm519 = vweird.f32 %v502
        %vm520 = vweird.f32 %v513
        %vm521 = vmor %vm519, %vm520
        %v522 = vsel %vm521, %v513, %v518
        %v523 = vpack.c.bf16 %v512, %v512
        %v524 = vpack.c.bf16 %v522, %v522
        %v525 = vunpack.c.l.bf16 %v523
        %v526 = vunpack.c.l.bf16 %v524
        %v527 = vsub.f32 %v512, %v525
        %v528 = vsub.f32 %v522, %v526
        %v530 = vsel %vm380, %v527, 0
        %v533 = vsel %vm380, %v528, 0
        %535 = vmatpush.msra.mxu0 0.0
        %536 = vmatpush.msra.mxu0 0.0
        %537 = vmatpush.msra.mxu0 0.0
        %538 = vmatpush.msra.mxu0 0.0
        %539 = vmatpush.msra.mxu0 0.0
        %540 = vmatpush.msra.mxu0 0.0
        %541 = vmatpush.msra.mxu0 0.0
        %542 = vmatpush.msra.mxu0 0.0
        %543 = vmatpush.msra.mxu0 0.0
        %544 = vmatpush.msra.mxu0 0.0
        %545 = vmatpush.msra.mxu0 0.0
        %546 = vmatpush.msra.mxu0 0.0
        %547 = vmatpush.msra.mxu0 0.0
        %548 = vmatpush.msra.mxu0 0.0
        %549 = vmatpush.msra.mxu0 0.0
        %550 = vmatpush.msra.mxu0 %v389
        %551 = vmatmul.f32.gmra.mxu0 %v530
        %v552 = vpop.f32.mrf.mxu0
        %v553 = vadd.f32 0.0, %v552
        %554 = vmatmul.f32.gmra.mxu0 %v533
        %v555 = vpop.f32.mrf.mxu0
        %v556 = vadd.f32 0.0, %v555
        %557 = vdwg.mxu0
        %v559 = vsel %vm380, %v525, 0
        %v562 = vsel %vm380, %v526, 0
        %564 = vmatpush.msra.mxu0 0.0
        %565 = vmatpush.msra.mxu0 0.0
        %566 = vmatpush.msra.mxu0 0.0
        %567 = vmatpush.msra.mxu0 0.0
        %568 = vmatpush.msra.mxu0 0.0
        %569 = vmatpush.msra.mxu0 0.0
        %570 = vmatpush.msra.mxu0 0.0
        %571 = vmatpush.msra.mxu0 0.0
        %572 = vmatpush.msra.mxu0 0.0
        %573 = vmatpush.msra.mxu0 0.0
        %574 = vmatpush.msra.mxu0 0.0
        %575 = vmatpush.msra.mxu0 0.0
        %576 = vmatpush.msra.mxu0 0.0
        %577 = vmatpush.msra.mxu0 0.0
        %578 = vmatpush.msra.mxu0 0.0
        %579 = vmatpush.msra.mxu0 %v389
        %580 = vmatmul.f32.gmra.mxu0 %v559
        %v581 = vpop.f32.mrf.mxu0
        %v582 = vadd.f32 %v553, %v581
        %583 = vmatmul.f32.gmra.mxu0 %v562
        %v584 = vpop.f32.mrf.mxu0
        %v585 = vadd.f32 %v556, %v584
        %586 = vdwg.mxu0
        %v587 = vmul.f32 %v443, %v582
        %v588 = vmul.f32 %v444, %v585
        %v590 = vperm.slane %v210, 0
        %v592 = vmul.f32 %v587, %v590
        %v593 = vmul.f32 %v588, %v590
        %v595 = vperm.slane %v211, 0
        %v597 = vadd.f32 %v592, %v595
        %v598 = vadd.f32 %v593, %v595
        %599 = vst [vmem:[%s205] sm:$0xff] %v597
        %600 = vst [vmem:[%s205 + $0x8] sm:$0xff] %v598
        %s601 = sand.u32 %s97, 1
        %s602 = scalar_lea.sflag [#allocation4], %s601
        %s603 = sand.u32 %s97, 1
        %s604 = smul.addr %s603, 16
        %s605 = scalar_lea.vmem [#allocation7], %s604
        // Predicated region
        $region41: #{tpu_custom_call.1} parent=31 // pred_check
          %p606 = pneg %p107
        $region42: #{tpu_custom_call.1} parent=31 // pred_check_branch
          %608 = sbr.rel (%p606) target = $region44
        $region43: #{tpu_custom_call.1} parent=31 // pred_region
          %s609 = smul.u32 2, %s21
          %611 = vsyncadd %s602, 0
          %s612 = smul.addr %s609, 8
          %s613 = scalar_lea.hbm %s3, %s612
          %s614 = sshll.u32 %s605, 4
          %s615 = int_to_ptr.vmem [resolvable:$true] %s614
          %s616 = sshll.u32 %s613, 4
          %s617 = int_to_ptr.hbm [resolvable:$true] %s616
          %622 = dma.vmem_to_hbm [thread:$0]  %s615, 256, %s617, %s602, 128, 128, 8
        $region44: #{tpu_custom_call.1} parent=31 // pred_fallthru
          _
      $region32: #{tpu_custom_call.1} parent=5 // pred_fallthru
        _
      %p623 = scmp.le.s32.totalorder 2, %s16
      // Predicated region
      $region45: #{tpu_custom_call.1} parent=5 // pred_check
        %p624 = pneg %p623
      $region46: #{tpu_custom_call.1} parent=5 // pred_check_branch
        %626 = sbr.rel (%p624) target = $region48
      $region47: #{tpu_custom_call.1} parent=5 // pred_region
        %s627 = ssub.s32 %s16, 2
        // Predicated region
        $region49: #{tpu_custom_call.1} parent=47 // pred_check
          %p628 = pneg %p113
        $region50: #{tpu_custom_call.1} parent=47 // pred_check_branch
          %630 = sbr.rel (%p628) target = $region52
        $region51: #{tpu_custom_call.1} parent=47 // pred_region
          %s631 = sand.u32 %s98, 1
          %s632 = scalar_lea.sflag [#allocation4], %s631
          %s633 = sand.u32 %s98, 1
          %s634 = smul.addr %s633, 16
          %s635 = scalar_lea.vmem [#allocation7], %s634
          %637 = dma.done %s632, 256
        $region52: #{tpu_custom_call.1} parent=47 // pred_fallthru
          _
      $region48: #{tpu_custom_call.1} parent=5 // pred_fallthru
        _
    $region6: #{tpu_custom_call.1} parent=1 // loop_footer
      %s20 = sadd.s32 1, %s16
    $region7: #{tpu_custom_call.1} parent=1 // loop_footer_branch
      %15 = sbr.rel target = $region3
    $region8: #{tpu_custom_call.1} parent=1 // loop_exit
      _
    %638 = vsyncpa [#allocation3], 1
    %s639 = scalar_lea.sflag [#allocation3], 1
    %640 = vsyncpa %s639, 1
    %641 = vsyncpa [#allocation6], 1
    %642 = vsyncpa [#allocation4], 1
    %s643 = scalar_lea.sflag [#allocation4], 1
    %644 = vsyncpa %s643, 1

</llo_original>
